<compile_context>
chip_gen: v7x
topology: tpu7x:2x2x1
jax: 0.10.0
libtpu: 0.0.40
codegen_flags: <defaults>
</compile_context>

<pallas_src>
from typing import NamedTuple

import jax
import jax.numpy as jnp
from jax.experimental import pallas as pl
from jax.experimental.pallas import tpu as pltpu


def _round_up(x, m):
    return ((x + m - 1) // m) * m


class PackedParams(NamedTuple):
    w1a: jax.Array  # (DP, DP) input-major half of linear1 acting on x1
    w1b: jax.Array  # (DP, DP) input-major half of linear1 acting on x2
    b1: jax.Array   # (1, DP)  f32
    wa: jax.Array   # (1, DP)  f32 attention weight row
    ba: jax.Array   # (1,)     f32 attention bias (SMEM scalar)


def pack_attention_fusion_params(w1, b1, w_att, b_att, *, use_bf16=False):
    """Pack / transpose / pad the module parameters ONCE (do this at init).

    w1: (D, 2D) PyTorch Linear(2D->D) weight [out x in].  b1: (D,).
    w_att: (1, D) Linear(D->1) weight.  b_att: (1,).
    """
    D = w1.shape[0]
    assert w1.shape == (D, 2 * D)
    DP = _round_up(max(D, 128), 128)
    f32 = jnp.float32
    wdt = jnp.bfloat16 if use_bf16 else f32

    # combined @ w1.T  ==  x1 @ w1[:, :D].T  +  x2 @ w1[:, D:].T
    w1a = jnp.zeros((DP, DP), wdt).at[:D, :D].set(jnp.transpose(w1[:, :D]).astype(wdt))
    w1b = jnp.zeros((DP, DP), wdt).at[:D, :D].set(jnp.transpose(w1[:, D:]).astype(wdt))
    b1p = jnp.zeros((1, DP), f32).at[0, :D].set(b1.astype(f32))
    wap = jnp.zeros((1, DP), f32).at[0, :D].set(w_att.reshape(-1).astype(f32))
    bap = b_att.reshape(1).astype(f32)
    return PackedParams(w1a, w1b, b1p, wap, bap)


def _attention_fusion_kernel(x1_ref, x2_ref, w1a_ref, w1b_ref, b1_ref, wa_ref,
                             ba_ref, o_ref):
    x1 = x1_ref[...]                                   # (TB, DP)
    x2 = x2_ref[...]                                   # (TB, DP)

    # linear1(cat([x1, x2])): two MXU dots on the static weight halves.
    # No concatenate -> no (TB, 2*DP) temporary, no extra vector stores.
    h = (jnp.dot(x1, w1a_ref[...], preferred_element_type=jnp.float32)
         + jnp.dot(x2, w1b_ref[...], preferred_element_type=jnp.float32)
         + b1_ref[...])
    h = jnp.maximum(h, 0.0)                            # ReLU

    # attention: Linear(D -> 1) as a VPU multiply + XLU lane reduction
    # (an N=1 matmul would waste the systolic array).
    scores = jnp.sum(h * wa_ref[...], axis=-1, keepdims=True) + ba_ref[0]  # (TB,1)
    w = jax.nn.sigmoid(scores)

    # fused = w * x1 + (1 - w) * x2  (epilogue in f32; output is f32)
    x1f = x1.astype(jnp.float32)
    x2f = x2.astype(jnp.float32)
    o_ref[...] = w * x1f + (1.0 - w) * x2f


def attention_fusion(x1, x2, params: PackedParams, *, use_bf16=False):
    """x1, x2: (B, D).  params: output of pack_attention_fusion_params."""
    B, D = x1.shape
    DP = params.w1a.shape[1]
    f32 = jnp.float32
    act_dtype = jnp.bfloat16 if use_bf16 else f32
    act_itemsize = jnp.dtype(act_dtype).itemsize
    w_itemsize = jnp.dtype(params.w1a.dtype).itemsize

    # --- tile first, then pad the batch to a multiple of the tile -----------
    act_budget = 24 << 20  # bytes allowed for double-buffered activation tiles

    def _fits(tb):
        return 3 * 2 * tb * DP * 4 <= act_budget  # x1 + x2 + out, 2 buffers, f32

    BP8 = _round_up(max(B, 8), 8)
    if BP8 <= 512 and _fits(BP8):
        TB = BP8                                    # single (or few) full tile(s)
    else:
        TB = next((t for t in (512, 256, 128, 64, 32, 16, 8) if _fits(t)), 8)
    BP = _round_up(max(B, 8), TB)

    # --- zero-copy fast path when already lane/sublane aligned --------------
    needs_pad = (DP != D) or (BP != B)
    if needs_pad:
        x1p = jnp.zeros((BP, DP), act_dtype).at[:B, :D].set(x1.astype(act_dtype))
        x2p = jnp.zeros((BP, DP), act_dtype).at[:B, :D].set(x2.astype(act_dtype))
    else:
        x1p = x1.astype(act_dtype)
        x2p = x2.astype(act_dtype)

    # --- VMEM budget: raise the scoped limit only when we actually need it --
    weight_bytes = 2 * DP * DP * w_itemsize
    est_vmem = (2 * weight_bytes                    # resident weights (double-buffered worst case)
                + 3 * 2 * TB * DP * 4               # double-buffered activation tiles
                + 4 * DP * 4 + (2 << 20))           # bias rows + headroom
    vmem_limit = None
    if est_vmem > (12 << 20):  # v5e default scoped VMEM is 16 MiB, v6e/v7x 32 MiB
        vmem_limit = min(int(est_vmem * 1.25), 100 << 20)

    cost = pl.CostEstimate(
        flops=4 * BP * DP * DP + 4 * BP * DP,
        transcendentals=2 * BP,
        bytes_accessed=3 * BP * DP * act_itemsize + weight_bytes + 6 * DP * 4,
    )

    out = pl.pallas_call(
        _attention_fusion_kernel,
        out_shape=jax.ShapeDtypeStruct((BP, DP), f32),
        grid=(BP // TB,),
        in_specs=[
            pl.BlockSpec((TB, DP), lambda i: (i, 0)),      # x1 batch tile
            pl.BlockSpec((TB, DP), lambda i: (i, 0)),      # x2 batch tile
            pl.BlockSpec((DP, DP), lambda i: (0, 0)),      # W1a (VMEM-resident)
            pl.BlockSpec((DP, DP), lambda i: (0, 0)),      # W1b (VMEM-resident)
            pl.BlockSpec((1, DP), lambda i: (0, 0)),       # b1 row
            pl.BlockSpec((1, DP), lambda i: (0, 0)),       # attention weight row
            pl.BlockSpec(memory_space=pltpu.SMEM),         # b_att scalar
        ],
        out_specs=pl.BlockSpec((TB, DP), lambda i: (i, 0)),
        compiler_params=pltpu.CompilerParams(
            dimension_semantics=("parallel",),             # megacore on v7x
            vmem_limit_bytes=vmem_limit,
        ),
        cost_estimate=cost,
    )(x1p, x2p, params.w1a, params.w1b, params.b1, params.wa, params.ba)

    if needs_pad:
        return out[:B, :D]
    return out


def _reference(x1, x2, w1, b1, w_att, b_att):
    combined = jnp.concatenate([x1, x2], axis=1)
    h = jnp.maximum(combined @ w1.T + b1, 0.0)
    scores = h @ w_att.T + b_att
    w = jax.nn.sigmoid(scores)
    return w * x1 + (1.0 - w) * x2


def _make_params(key, D):
    k3, k4, k5, k6 = jax.random.split(key, 4)
    bound1 = 1.0 / jnp.sqrt(2.0 * D)
    w1 = jax.random.uniform(k3, (D, 2 * D), minval=-bound1, maxval=bound1)
    b1 = jax.random.uniform(k4, (D,), minval=-bound1, maxval=bound1)
    bound2 = 1.0 / jnp.sqrt(1.0 * D)
    w_att = jax.random.uniform(k5, (1, D), minval=-bound2, maxval=bound2)
    b_att = jax.random.uniform(k6, (1,), minval=-bound2, maxval=bound2)
    return w1, b1, w_att, b_att


if __name__ == "__main__":
    key = jax.random.PRNGKey(0)
    kx, kp, kx2, kp2 = jax.random.split(key, 4)

    # --- case 1: small, unaligned (exercises the padding path) --------------
    B, D = 8, 32
    k1, k2 = jax.random.split(kx)
    x1 = jax.random.normal(k1, (B, D), dtype=jnp.float32)
    x2 = jax.random.normal(k2, (B, D), dtype=jnp.float32)
    w1, b1, w_att, b_att = _make_params(kp, D)

    params = pack_attention_fusion_params(w1, b1, w_att, b_att)   # packed once
    out = attention_fusion(x1, x2, params)
    jax.block_until_ready(out)

    ref = _reference(x1, x2, w1, b1, w_att, b_att)
    assert out.shape == (B, D)
    assert jnp.allclose(out, ref, atol=1e-5, rtol=1e-5), "mismatch vs reference (case 1)"

    # --- case 2: lane/sublane aligned (exercises the zero-copy fast path) ---
    B2, D2 = 16, 128
    k1b, k2b = jax.random.split(kx2)
    x1b = jax.random.normal(k1b, (B2, D2), dtype=jnp.float32)
    x2b = jax.random.normal(k2b, (B2, D2), dtype=jnp.float32)
    w1b_, b1b_, w_attb_, b_attb_ = _make_params(kp2, D2)

    params_b = pack_attention_fusion_params(w1b_, b1b_, w_attb_, b_attb_)
    out_b = attention_fusion(x1b, x2b, params_b)
    jax.block_until_ready(out_b)

    ref_b = _reference(x1b, x2b, w1b_, b1b_, w_attb_, b_attb_)
    assert out_b.shape == (B2, D2)
    assert jnp.allclose(out_b, ref_b, atol=1e-5, rtol=1e-5), "mismatch vs reference (case 2)"

    print("KERNEL_OK")
</pallas_src>

<mosaic_0001>
module attributes {stable_mosaic.version = 11 : i64} {
  func.func @_attention_fusion_kernel(%arg0: i32, %arg1: memref<8x128xf32, #tpu.memory_space<vmem>>, %arg2: memref<8x128xf32, #tpu.memory_space<vmem>>, %arg3: memref<128x128xf32, #tpu.memory_space<vmem>>, %arg4: memref<128x128xf32, #tpu.memory_space<vmem>>, %arg5: memref<1x128xf32, #tpu.memory_space<vmem>>, %arg6: memref<1x128xf32, #tpu.memory_space<vmem>>, %arg7: memref<1xf32, #tpu.memory_space<smem>>, %arg8: memref<8x128xf32, #tpu.memory_space<vmem>>) attributes {dimension_semantics = [#tpu.dimension_semantics<parallel>], iteration_bounds = array<i64: 1>, scalar_prefetch = 0 : i64, scratch_operands = 0 : i64, tpu.core_type = #tpu.core_type<tc>, window_params = [{transform_indices = @transform_0, window_bounds = array<i64: 8, 128>}, {transform_indices = @transform_1, window_bounds = array<i64: 8, 128>}, {pipeline_mode = #tpu.pipeline_mode<synchronous>, transform_indices = @transform_2, window_bounds = array<i64: 128, 128>}, {pipeline_mode = #tpu.pipeline_mode<synchronous>, transform_indices = @transform_3, window_bounds = array<i64: 128, 128>}, {pipeline_mode = #tpu.pipeline_mode<synchronous>, transform_indices = @transform_4, window_bounds = array<i64: 1, 128>}, {pipeline_mode = #tpu.pipeline_mode<synchronous>, transform_indices = @transform_5, window_bounds = array<i64: 1, 128>}, {transform_indices = @transform_6, window_bounds = array<i64: 1>}, {transform_indices = @transform_7, window_bounds = array<i64: 8, 128>}]} {
    %c0 = arith.constant 0 : index
    %c0_0 = arith.constant 0 : index
    %0 = vector.load %arg1[%c0, %c0_0] : memref<8x128xf32, #tpu.memory_space<vmem>>, vector<8x128xf32>
    %c0_1 = arith.constant 0 : index
    %c0_2 = arith.constant 0 : index
    %1 = vector.load %arg2[%c0_1, %c0_2] : memref<8x128xf32, #tpu.memory_space<vmem>>, vector<8x128xf32>
    %c0_3 = arith.constant 0 : index
    %c0_4 = arith.constant 0 : index
    %2 = vector.load %arg3[%c0_3, %c0_4] : memref<128x128xf32, #tpu.memory_space<vmem>>, vector<128x128xf32>
    %cst = arith.constant dense<0.000000e+00> : vector<8x128xf32>
    %3 = tpu.matmul %0, %2, %cst {dimension_numbers = #tpu.dot_dimension_numbers<[1], [0], [0], [1], [0, 0, 1, 1], [], []>} : vector<8x128xf32>, vector<128x128xf32>, vector<8x128xf32> -> vector<8x128xf32>
    %c0_5 = arith.constant 0 : index
    %c0_6 = arith.constant 0 : index
    %4 = vector.load %arg4[%c0_5, %c0_6] : memref<128x128xf32, #tpu.memory_space<vmem>>, vector<128x128xf32>
    %cst_7 = arith.constant dense<0.000000e+00> : vector<8x128xf32>
    %5 = tpu.matmul %1, %4, %cst_7 {dimension_numbers = #tpu.dot_dimension_numbers<[1], [0], [0], [1], [0, 0, 1, 1], [], []>} : vector<8x128xf32>, vector<128x128xf32>, vector<8x128xf32> -> vector<8x128xf32>
    %6 = arith.addf %3, %5 : vector<8x128xf32>
    %c0_8 = arith.constant 0 : index
    %c0_9 = arith.constant 0 : index
    %7 = vector.load %arg5[%c0_8, %c0_9] : memref<1x128xf32, #tpu.memory_space<vmem>>, vector<1x128xf32>
    %8 = vector.broadcast %7 : vector<1x128xf32> to vector<8x128xf32>
    %9 = arith.addf %6, %8 : vector<8x128xf32>
    %cst_10 = arith.constant 0.000000e+00 : f32
    %10 = vector.broadcast %cst_10 : f32 to vector<8x128xf32>
    %11 = arith.maximumf %9, %10 : vector<8x128xf32>
    %c0_11 = arith.constant 0 : index
    %c0_12 = arith.constant 0 : index
    %12 = vector.load %arg6[%c0_11, %c0_12] : memref<1x128xf32, #tpu.memory_space<vmem>>, vector<1x128xf32>
    %13 = vector.broadcast %12 : vector<1x128xf32> to vector<8x128xf32>
    %14 = arith.mulf %11, %13 : vector<8x128xf32>
    %cst_13 = arith.constant dense<0.000000e+00> : vector<8xf32>
    %15 = vector.multi_reduction <add>, %14, %cst_13 [1] : vector<8x128xf32> to vector<8xf32>
    %16 = vector.shape_cast %15 : vector<8xf32> to vector<8x1xf32>
    %c0_14 = arith.constant 0 : index
    %17 = memref.load %arg7[%c0_14] : memref<1xf32, #tpu.memory_space<smem>>
    %18 = vector.broadcast %17 : f32 to vector<8x1xf32>
    %19 = arith.addf %16, %18 : vector<8x1xf32>
    %20 = arith.negf %19 : vector<8x1xf32>
    %21 = math.exp %20 : vector<8x1xf32>
    %cst_15 = arith.constant 1.000000e+00 : f32
    %22 = vector.broadcast %cst_15 : f32 to vector<8x1xf32>
    %23 = arith.addf %22, %21 : vector<8x1xf32>
    %24 = arith.divf %22, %23 : vector<8x1xf32>
    %25 = vector.broadcast %24 : vector<8x1xf32> to vector<8x128xf32>
    %26 = arith.mulf %25, %0 : vector<8x128xf32>
    %cst_16 = arith.constant 1.000000e+00 : f32
    %27 = vector.broadcast %cst_16 : f32 to vector<8x1xf32>
    %28 = arith.subf %27, %24 : vector<8x1xf32>
    %29 = vector.broadcast %28 : vector<8x1xf32> to vector<8x128xf32>
    %30 = arith.mulf %29, %1 : vector<8x128xf32>
    %31 = arith.addf %26, %30 : vector<8x128xf32>
    %c0_17 = arith.constant 0 : index
    %c0_18 = arith.constant 0 : index
    %32 = vector.load %arg8[%c0_17, %c0_18] : memref<8x128xf32, #tpu.memory_space<vmem>>, vector<8x128xf32>
    tpu.vector_store %arg8[%c0_17, %c0_18], %31 {strides = array<i32>} : memref<8x128xf32, #tpu.memory_space<vmem>>, vector<8x128xf32>,
    return
  }
  func.func @transform_0(%arg0: i32) -> (i32, i32) {
    %c0_i32 = arith.constant 0 : i32
    %c0_i32_0 = arith.constant 0 : i32
    return %arg0, %c0_i32 : i32, i32
  }
  func.func @transform_1(%arg0: i32) -> (i32, i32) {
    %c0_i32 = arith.constant 0 : i32
    %c0_i32_0 = arith.constant 0 : i32
    return %arg0, %c0_i32 : i32, i32
  }
  func.func @transform_2(%arg0: i32) -> (i32, i32) {
    %c0_i32 = arith.constant 0 : i32
    %c0_i32_0 = arith.constant 0 : i32
    %c0_i32_1 = arith.constant 0 : i32
    return %c0_i32, %c0_i32_0 : i32, i32
  }
  func.func @transform_3(%arg0: i32) -> (i32, i32) {
    %c0_i32 = arith.constant 0 : i32
    %c0_i32_0 = arith.constant 0 : i32
    %c0_i32_1 = arith.constant 0 : i32
    return %c0_i32, %c0_i32_0 : i32, i32
  }
  func.func @transform_4(%arg0: i32) -> (i32, i32) {
    %c0_i32 = arith.constant 0 : i32
    %c0_i32_0 = arith.constant 0 : i32
    %c0_i32_1 = arith.constant 0 : i32
    return %c0_i32, %c0_i32_0 : i32, i32
  }
  func.func @transform_5(%arg0: i32) -> (i32, i32) {
    %c0_i32 = arith.constant 0 : i32
    %c0_i32_0 = arith.constant 0 : i32
    %c0_i32_1 = arith.constant 0 : i32
    return %c0_i32, %c0_i32_0 : i32, i32
  }
  func.func @transform_6(%arg0: i32) -> i32 {
    %c0_i32 = arith.constant 0 : i32
    %c0_i32_0 = arith.constant 0 : i32
    return %c0_i32 : i32
  }
  func.func @transform_7(%arg0: i32) -> (i32, i32) {
    %c0_i32 = arith.constant 0 : i32
    %c0_i32_0 = arith.constant 0 : i32
    return %arg0, %c0_i32 : i32, i32
  }
}

</mosaic_0001>

<llo_original>
// kernel: tpu_custom_call.1
$region0: #{tpu_custom_call.1}
  #allocation0 [shape = 'u32[]', space=smem, size = 0x4, offset = 0x4, fixed_abs, tag = 'smem constant byte address 0x4 - core index']
  #allocation1 [shape = 'u32[144,128]{1,0:T(1,128)}', space=vmem, size = 0x12000, scoped, tag = 'internal scratch']
  #allocation2 [shape = 'f32[1]{0:T(128)S(6)}', space=smem, size = 0x200, scoped, tag = 'scoped memory for tpu_custom_call.1']
  %s0 = inlined_call_operand.hbm [shape: f32[8,128], index: 0, kind: input, shape index: {}]
  %s1 = inlined_call_operand.hbm [shape: f32[8,128], index: 1, kind: input, shape index: {}]
  %s2 = inlined_call_operand.hbm [shape: f32[128,128], index: 2, kind: input, shape index: {}]
  %s3 = inlined_call_operand.hbm [shape: f32[128,128], index: 3, kind: input, shape index: {}]
  %s4 = inlined_call_operand.vmem [shape: f32[1,128], index: 4, kind: input, shape index: {}]
  %s5 = inlined_call_operand.vmem [shape: f32[1,128], index: 5, kind: input, shape index: {}]
  %s6 = inlined_call_operand.<no memory space> [shape: f32[1], index: 6, kind: input, shape index: {}]
  %s7 = inlined_call_operand.hbm [shape: f32[8,128], index: 7, kind: output, shape index: {}]
  %s8 = sld [smem:[#allocation0]]
  $region54: #{tpu_custom_call.1} parent=0
    _
  %s10 = ssub.s32 1, %s8
  %s11 = scalar_select 0, %s10, %s8
  %12 = sst [smem:[#allocation2]] %s6
  $region1: #{tpu_custom_call.1} parent=0
    #allocation3 [shape = 'u8[4096]{0}', space=vmem, size = 0x1000, scoped, tag = 'input window, operand 0, single buffered']
    #allocation4 [shape = 's32[1]{0}', space=sflag, size = 0x4, scoped, tag = 'scoped memory for tpu_custom_call.1']
    #allocation5 [shape = 's32[1]{0}', space=sflag, size = 0x4, scoped, tag = 'scoped memory for tpu_custom_call.1']
    #allocation6 [shape = 'u8[4096]{0}', space=vmem, size = 0x1000, scoped, tag = 'input window, operand 1, single buffered']
    #allocation7 [shape = 's32[1]{0}', space=sflag, size = 0x4, scoped, tag = 'scoped memory for tpu_custom_call.1']
    #allocation8 [shape = 'u8[65536]{0}', space=vmem, size = 0x10000, scoped, tag = 'input window, operand 2, single buffered']
    #allocation9 [shape = 'u8[65536]{0}', space=vmem, size = 0x10000, scoped, tag = 'input window, operand 3, single buffered']
    #allocation10 [shape = 's32[1]{0}', space=sflag, size = 0x4, scoped, tag = 'scoped memory for tpu_custom_call.1']
    #allocation11 [shape = 'u8[4096]{0}', space=vmem, size = 0x1000, scoped, tag = 'output window, operand 0, single buffered']
    %13 = vsyncpa [#allocation4], 0
    %14 = vsyncpa [#allocation7], 0
    %15 = vsyncpa [#allocation10], 0
    %16 = vsyncpa [#allocation5], 0
    // Predicated region
    $region2: #{tpu_custom_call.1} parent=1 // pred_check
      _
    $region3: #{tpu_custom_call.1} parent=1 // pred_check_branch
      %18 = sbr.rel (0) target = $region5
    $region4: #{tpu_custom_call.1} parent=1 // pred_region
      %s20 = ssub.s32 128, 128
      %21 = vsyncadd [#allocation4], %s20
      %s23 = sshll.u32 [#allocation3], 4
      %s24 = int_to_ptr.vmem [resolvable:$true] %s23
      %26 = dma.hbm_to_vmem [thread:$0]  %s0, 128, %s24, [#allocation4]
    $region5: #{tpu_custom_call.1} parent=1 // pred_fallthru
      _
    // Predicated region
    $region6: #{tpu_custom_call.1} parent=1 // pred_check
      _
    $region7: #{tpu_custom_call.1} parent=1 // pred_check_branch
      %28 = sbr.rel (0) target = $region9
    $region8: #{tpu_custom_call.1} parent=1 // pred_region
      %s30 = ssub.s32 128, 128
      %31 = vsyncadd [#allocation7], %s30
      %s33 = sshll.u32 [#allocation6], 4
      %s34 = int_to_ptr.vmem [resolvable:$true] %s33
      %36 = dma.hbm_to_vmem [thread:$0]  %s1, 128, %s34, [#allocation7]
    $region9: #{tpu_custom_call.1} parent=1 // pred_fallthru
      _
    // Predicated region
    $region10: #{tpu_custom_call.1} parent=1 // pred_check
      _
    $region11: #{tpu_custom_call.1} parent=1 // pred_check_branch
      %38 = sbr.rel (0) target = $region13
    $region12: #{tpu_custom_call.1} parent=1 // pred_region
      %s40 = ssub.s32 2048, 2048
      %41 = vsyncadd [#allocation7], %s40
      %s42 = sshll.u32 [#allocation8], 4
      %s43 = int_to_ptr.vmem [resolvable:$true] %s42
      %48 = dma.hbm_to_vmem [thread:$0]  %s2, 2048, %s43, [#allocation7], 128, 128, 8
    $region13: #{tpu_custom_call.1} parent=1 // pred_fallthru
      _
    // Predicated region
    $region14: #{tpu_custom_call.1} parent=1 // pred_check
      _
    $region15: #{tpu_custom_call.1} parent=1 // pred_check_branch
      %50 = sbr.rel (0) target = $region17
    $region16: #{tpu_custom_call.1} parent=1 // pred_region
      %s52 = ssub.s32 2048, 2048
      %53 = vsyncadd [#allocation10], %s52
      %s54 = sshll.u32 [#allocation9], 4
      %s55 = int_to_ptr.vmem [resolvable:$true] %s54
      %60 = dma.hbm_to_vmem [thread:$0]  %s3, 2048, %s55, [#allocation10], 128, 128, 8
    $region17: #{tpu_custom_call.1} parent=1 // pred_fallthru
      _
    // Predicated region
    $region18: #{tpu_custom_call.1} parent=1 // pred_check
      _
    $region19: #{tpu_custom_call.1} parent=1 // pred_check_branch
      %62 = sbr.rel (0) target = $region21
    $region20: #{tpu_custom_call.1} parent=1 // pred_region
      _
    $region21: #{tpu_custom_call.1} parent=1 // pred_fallthru
      _
    // Predicated region
    $region22: #{tpu_custom_call.1} parent=1 // pred_check
      _
    $region23: #{tpu_custom_call.1} parent=1 // pred_check_branch
      %64 = sbr.rel (0) target = $region25
    $region24: #{tpu_custom_call.1} parent=1 // pred_region
      _
    $region25: #{tpu_custom_call.1} parent=1 // pred_fallthru
      _
    // Predicated region
    $region26: #{tpu_custom_call.1} parent=1 // pred_check
      _
    $region27: #{tpu_custom_call.1} parent=1 // pred_check_branch
      %66 = sbr.rel (0) target = $region29
    $region28: #{tpu_custom_call.1} parent=1 // pred_region
      _
    $region29: #{tpu_custom_call.1} parent=1 // pred_fallthru
      _
    // Predicated region
    $region30: #{tpu_custom_call.1} parent=1 // pred_check
      _
    $region31: #{tpu_custom_call.1} parent=1 // pred_check_branch
      %68 = sbr.rel (0) target = $region33
    $region32: #{tpu_custom_call.1} parent=1 // pred_region
      %69 = dma.done [#allocation4], 128
    $region33: #{tpu_custom_call.1} parent=1 // pred_fallthru
      _
    // Predicated region
    $region34: #{tpu_custom_call.1} parent=1 // pred_check
      _
    $region35: #{tpu_custom_call.1} parent=1 // pred_check_branch
      %71 = sbr.rel (0) target = $region37
    $region36: #{tpu_custom_call.1} parent=1 // pred_region
      %72 = dma.done [#allocation7], 128
    $region37: #{tpu_custom_call.1} parent=1 // pred_fallthru
      _
    // Predicated region
    $region38: #{tpu_custom_call.1} parent=1 // pred_check
      _
    $region39: #{tpu_custom_call.1} parent=1 // pred_check_branch
      %74 = sbr.rel (0) target = $region41
    $region40: #{tpu_custom_call.1} parent=1 // pred_region
      %75 = dma.done [#allocation7], 2048
    $region41: #{tpu_custom_call.1} parent=1 // pred_fallthru
      _
    // Predicated region
    $region42: #{tpu_custom_call.1} parent=1 // pred_check
      _
    $region43: #{tpu_custom_call.1} parent=1 // pred_check_branch
      %77 = sbr.rel (0) target = $region45
    $region44: #{tpu_custom_call.1} parent=1 // pred_region
      %78 = dma.done [#allocation10], 2048
    $region45: #{tpu_custom_call.1} parent=1 // pred_fallthru
      _
    %v79 = vld [vmem:[#allocation3] sm:$0xff]
    %v80 = vld [vmem:[#allocation6] sm:$0xff]
    %v81 = vld [vmem:[#allocation8] sm:$0xff]
    %v82 = vld [vmem:[#allocation8 + $0x8] sm:$0xff]
    %v83 = vld [vmem:[#allocation8 + $0x10] sm:$0xff]
    %v84 = vld [vmem:[#allocation8 + $0x18] sm:$0xff]
    %v85 = vld [vmem:[#allocation8 + $0x20] sm:$0xff]
    %v86 = vld [vmem:[#allocation8 + $0x28] sm:$0xff]
    %v87 = vld [vmem:[#allocation8 + $0x30] sm:$0xff]
    %v88 = vld [vmem:[#allocation8 + $0x38] sm:$0xff]
    %v89 = vld [vmem:[#allocation8 + $0x40] sm:$0xff]
    %v90 = vld [vmem:[#allocation8 + $0x48] sm:$0xff]
    %v91 = vld [vmem:[#allocation8 + $0x50] sm:$0xff]
    %v92 = vld [vmem:[#allocation8 + $0x58] sm:$0xff]
    %v93 = vld [vmem:[#allocation8 + $0x60] sm:$0xff]
    %v94 = vld [vmem:[#allocation8 + $0x68] sm:$0xff]
    %v95 = vld [vmem:[#allocation8 + $0x70] sm:$0xff]
    %v96 = vld [vmem:[#allocation8 + $0x78] sm:$0xff]
    %v97 = vld [vmem:[#allocation9] sm:$0xff]
    %v98 = vld [vmem:[#allocation9 + $0x8] sm:$0xff]
    %v99 = vld [vmem:[#allocation9 + $0x10] sm:$0xff]
    %v100 = vld [vmem:[#allocation9 + $0x18] sm:$0xff]
    %v101 = vld [vmem:[#allocation9 + $0x20] sm:$0xff]
    %v102 = vld [vmem:[#allocation9 + $0x28] sm:$0xff]
    %v103 = vld [vmem:[#allocation9 + $0x30] sm:$0xff]
    %v104 = vld [vmem:[#allocation9 + $0x38] sm:$0xff]
    %v105 = vld [vmem:[#allocation9 + $0x40] sm:$0xff]
    %v106 = vld [vmem:[#allocation9 + $0x48] sm:$0xff]
    %v107 = vld [vmem:[#allocation9 + $0x50] sm:$0xff]
    %v108 = vld [vmem:[#allocation9 + $0x58] sm:$0xff]
    %v109 = vld [vmem:[#allocation9 + $0x60] sm:$0xff]
    %v110 = vld [vmem:[#allocation9 + $0x68] sm:$0xff]
    %v111 = vld [vmem:[#allocation9 + $0x70] sm:$0xff]
    %v112 = vld [vmem:[#allocation9 + $0x78] sm:$0xff]
    %113 = vmatprep.subr.mxu0 0.0
    %114 = vmatpush1.msra.mxu0 %v97
    %115 = vmatprep.subr.mxu0 0.0
    %116 = vmatpush1.msra.mxu0 %v98
    %117 = vmatprep.subr.mxu0 0.0
    %118 = vmatpush1.msra.mxu0 %v99
    %119 = vmatprep.subr.mxu0 0.0
    %120 = vmatpush1.msra.mxu0 %v100
    %121 = vmatprep.subr.mxu0 0.0
    %122 = vmatpush1.msra.mxu0 %v101
    %123 = vmatprep.subr.mxu0 0.0
    %124 = vmatpush1.msra.mxu0 %v102
    %125 = vmatprep.subr.mxu0 0.0
    %126 = vmatpush1.msra.mxu0 %v103
    %127 = vmatprep.subr.mxu0 0.0
    %128 = vmatpush1.msra.mxu0 %v104
    %129 = vmatprep.subr.mxu0 0.0
    %130 = vmatpush1.msra.mxu0 %v105
    %131 = vmatprep.subr.mxu0 0.0
    %132 = vmatpush1.msra.mxu0 %v106
    %133 = vmatprep.subr.mxu0 0.0
    %134 = vmatpush1.msra.mxu0 %v107
    %135 = vmatprep.subr.mxu0 0.0
    %136 = vmatpush1.msra.mxu0 %v108
    %137 = vmatprep.subr.mxu0 0.0
    %138 = vmatpush1.msra.mxu0 %v109
    %139 = vmatprep.subr.mxu0 0.0
    %140 = vmatpush1.msra.mxu0 %v110
    %141 = vmatprep.subr.mxu0 0.0
    %142 = vmatpush1.msra.mxu0 %v111
    %143 = vmatprep.subr.mxu0 0.0
    %144 = vmatpush1.msra.mxu0 %v112
    %145 = vmatprep.subr.mxu0 0.0
    %146 = vmatpush1.msra.mxu0 0.0
    %147 = vmatprep.subr.mxu0 0.0
    %148 = vmatpush1.msra.mxu0 0.0
    %149 = vmatprep.subr.mxu0 0.0
    %150 = vmatpush1.msra.mxu0 0.0
    %151 = vmatprep.subr.mxu0 0.0
    %152 = vmatpush1.msra.mxu0 0.0
    %153 = vmatprep.subr.mxu0 0.0
    %154 = vmatpush1.msra.mxu0 0.0
    %155 = vmatprep.subr.mxu0 0.0
    %156 = vmatpush1.msra.mxu0 0.0
    %157 = vmatprep.subr.mxu0 0.0
    %158 = vmatpush1.msra.mxu0 0.0
    %159 = vmatprep.subr.mxu0 0.0
    %160 = vmatpush1.msra.mxu0 0.0
    %161 = vmatprep.subr.mxu0 0.0
    %162 = vmatpush1.msra.mxu0 0.0
    %163 = vmatprep.subr.mxu0 0.0
    %164 = vmatpush1.msra.mxu0 0.0
    %165 = vmatprep.subr.mxu0 0.0
    %166 = vmatpush1.msra.mxu0 0.0
    %167 = vmatprep.subr.mxu0 0.0
    %168 = vmatpush1.msra.mxu0 0.0
    %169 = vmatprep.subr.mxu0 0.0
    %170 = vmatpush1.msra.mxu0 0.0
    %171 = vmatprep.subr.mxu0 0.0
    %172 = vmatpush1.msra.mxu0 0.0
    %173 = vmatprep.subr.mxu0 0.0
    %174 = vmatpush1.msra.mxu0 0.0
    %175 = vmatprep.subr.mxu0 0.0
    %176 = vmatpush1.msra.mxu0 0.0
    %177 = vmatprep.mubr.f32.mxu0 0.0
    %178 = vmatmul.mubr.f32.gmra.mrb[0].mxu0 %v80
    %v179 = vpop.f32.mrb[0].mxu0
    %v180 = vadd.f32 0.0, %v179
    %v181 = vpop.f32.mrb[0].mxu0
    %182 = vdwg.mxu0
    %183 = vmatprep.subr.mxu0 0.0
    %184 = vmatpush1.msra.mxu0 %v81
    %185 = vmatprep.subr.mxu0 0.0
    %186 = vmatpush1.msra.mxu0 %v82
    %187 = vmatprep.subr.mxu0 0.0
    %188 = vmatpush1.msra.mxu0 %v83
    %189 = vmatprep.subr.mxu0 0.0
    %190 = vmatpush1.msra.mxu0 %v84
    %191 = vmatprep.subr.mxu0 0.0
    %192 = vmatpush1.msra.mxu0 %v85
    %193 = vmatprep.subr.mxu0 0.0
    %194 = vmatpush1.msra.mxu0 %v86
    %195 = vmatprep.subr.mxu0 0.0
    %196 = vmatpush1.msra.mxu0 %v87
    %197 = vmatprep.subr.mxu0 0.0
    %198 = vmatpush1.msra.mxu0 %v88
    %199 = vmatprep.subr.mxu0 0.0
    %200 = vmatpush1.msra.mxu0 %v89
    %201 = vmatprep.subr.mxu0 0.0
    %202 = vmatpush1.msra.mxu0 %v90
    %203 = vmatprep.subr.mxu0 0.0
    %204 = vmatpush1.msra.mxu0 %v91
    %205 = vmatprep.subr.mxu0 0.0
    %206 = vmatpush1.msra.mxu0 %v92
    %207 = vmatprep.subr.mxu0 0.0
    %208 = vmatpush1.msra.mxu0 %v93
    %209 = vmatprep.subr.mxu0 0.0
    %210 = vmatpush1.msra.mxu0 %v94
    %211 = vmatprep.subr.mxu0 0.0
    %212 = vmatpush1.msra.mxu0 %v95
    %213 = vmatprep.subr.mxu0 0.0
    %214 = vmatpush1.msra.mxu0 %v96
    %215 = vmatprep.subr.mxu0 0.0
    %216 = vmatpush1.msra.mxu0 0.0
    %217 = vmatprep.subr.mxu0 0.0
    %218 = vmatpush1.msra.mxu0 0.0
    %219 = vmatprep.subr.mxu0 0.0
    %220 = vmatpush1.msra.mxu0 0.0
    %221 = vmatprep.subr.mxu0 0.0
    %222 = vmatpush1.msra.mxu0 0.0
    %223 = vmatprep.subr.mxu0 0.0
    %224 = vmatpush1.msra.mxu0 0.0
    %225 = vmatprep.subr.mxu0 0.0
    %226 = vmatpush1.msra.mxu0 0.0
    %227 = vmatprep.subr.mxu0 0.0
    %228 = vmatpush1.msra.mxu0 0.0
    %229 = vmatprep.subr.mxu0 0.0
    %230 = vmatpush1.msra.mxu0 0.0
    %231 = vmatprep.subr.mxu0 0.0
    %232 = vmatpush1.msra.mxu0 0.0
    %233 = vmatprep.subr.mxu0 0.0
    %234 = vmatpush1.msra.mxu0 0.0
    %235 = vmatprep.subr.mxu0 0.0
    %236 = vmatpush1.msra.mxu0 0.0
    %237 = vmatprep.subr.mxu0 0.0
    %238 = vmatpush1.msra.mxu0 0.0
    %239 = vmatprep.subr.mxu0 0.0
    %240 = vmatpush1.msra.mxu0 0.0
    %241 = vmatprep.subr.mxu0 0.0
    %242 = vmatpush1.msra.mxu0 0.0
    %243 = vmatprep.subr.mxu0 0.0
    %244 = vmatpush1.msra.mxu0 0.0
    %245 = vmatprep.subr.mxu0 0.0
    %246 = vmatpush1.msra.mxu0 0.0
    %247 = vmatprep.mubr.f32.mxu0 0.0
    %248 = vmatmul.mubr.f32.gmra.mrb[0].mxu0 %v79
    %v249 = vpop.f32.mrb[0].mxu0
    %v250 = vadd.f32 %v180, %v249
    %v251 = vpop.f32.mrb[0].mxu0
    %252 = vdwg.mxu0
    %v253 = vld [vmem:[%s4] sm:$0x1]
    %v255 = vlaneseq
    %v256 = vshrl.u32 %v255, 7
    %v257 = vsub.s32 0, %v256
    %v258 = vrot.slane %v253, %v257
    %v260 = vadd.f32 %v250, %v258
    %v261 = vmax.f32 %v260, 0.0
    %v262 = vld [vmem:[%s5] sm:$0x1]
    %v264 = vlaneseq
    %v265 = vshrl.u32 %v264, 7
    %v266 = vsub.s32 0, %v265
    %v267 = vrot.slane %v262, %v266
    %v269 = vmul.f32 %v261, %v267
    %270 = vadd.xlane.f32.xlu0 %v269
    %v271 = vpop.xlane.xlu0 %270
    %s272 = sld [smem:[#allocation2]]
    %v273 = vstv %s272
    %v274 = vadd.f32 %v271, %v273
    %v275 = vxor.u32 %v274, 2147483648
    %v276 = vmul.f32 %v275, 1.442695
    %v277 = vpow.pop %v276
    %v278 = vadd.f32 %v277, 1.0
    %v279 = vrcp.pop %v278
    %v280 = vmul.f32 1.0, %v279
    %v281 = vmul.f32 %v280, %v79
    %v282 = vsub.f32 1.0, %v280
    %v283 = vmul.f32 %v282, %v80
    %v284 = vadd.f32 %v281, %v283
    %285 = vst [vmem:[#allocation11] sm:$0xff] %v284
    // Predicated region
    $region46: #{tpu_custom_call.1} parent=1 // pred_check
      _
    $region47: #{tpu_custom_call.1} parent=1 // pred_check_branch
      %287 = sbr.rel (0) target = $region49
    $region48: #{tpu_custom_call.1} parent=1 // pred_region
      %s289 = ssub.s32 128, 128
      %290 = vsyncadd [#allocation5], %s289
      %s292 = sshll.u32 [#allocation11], 4
      %s293 = int_to_ptr.vmem [resolvable:$true] %s292
      %295 = dma.vmem_to_hbm [thread:$0]  %s293, 128, %s7, [#allocation5]
    $region49: #{tpu_custom_call.1} parent=1 // pred_fallthru
      _
    // Predicated region
    $region50: #{tpu_custom_call.1} parent=1 // pred_check
      _
    $region51: #{tpu_custom_call.1} parent=1 // pred_check_branch
      %297 = sbr.rel (0) target = $region53
    $region52: #{tpu_custom_call.1} parent=1 // pred_region
      %298 = dma.done [#allocation5], 128
    $region53: #{tpu_custom_call.1} parent=1 // pred_fallthru
      _
    %299 = vsyncpa [#allocation4], 1
    %300 = vsyncpa [#allocation7], 1
    %301 = vsyncpa [#allocation10], 1
    %302 = vsyncpa [#allocation5], 1

</llo_original>
